<compile_context>
chip_gen: v5e
topology: v5e:2x2
jax: 0.10.0
libtpu: 0.0.40
codegen_flags: <defaults>
</compile_context>

<pallas_src>
import functools

import jax
import jax.numpy as jnp
from jax.experimental import pallas as pl
from jax.experimental.pallas import tpu as pltpu


def _round_up(x, m):
    return ((x + m - 1) // m) * m


def _label_smoothing_kernel(pred_ref, target_ref, out_ref, *,
                            classes, smoothing, batch):
    """One batch tile: stable log-softmax + smoothed CE, per-row losses out."""
    confidence = jnp.float32(1.0 - smoothing)
    smooth_val = jnp.float32(smoothing / (classes - 1))

    x = pred_ref[...].astype(jnp.float32)                       # (TB, Cp)
    tb, cp = x.shape

    col = jax.lax.broadcasted_iota(jnp.int32, (tb, cp), 1)
    col_valid = col < classes                                    # mask padded classes

    # Numerically-stable log-sum-exp over the valid class columns only.
    x_m = jnp.where(col_valid, x, -jnp.inf)
    row_max = jnp.max(x_m, axis=-1, keepdims=True)               # (TB, 1)
    shifted = x_m - row_max                                      # -inf on padded cols
    lse = jnp.log(jnp.sum(jnp.exp(shifted), axis=-1, keepdims=True))

    # sum_c logp[b,c]  =  sum_c shifted[b,c] - classes * lse[b]   (valid cols only)
    sum_shifted = jnp.sum(jnp.where(col_valid, shifted, 0.0),
                          axis=-1, keepdims=True)
    sum_logp = sum_shifted - jnp.float32(classes) * lse           # (TB, 1)

    # logp at the target class: scatter -> lane-iota compare + row sum.
    tgt = target_ref[...]                                         # (TB, 1) int32
    shifted_t = jnp.sum(jnp.where(col == tgt, shifted, 0.0),
                        axis=-1, keepdims=True)
    logp_t = shifted_t - lse                                      # (TB, 1)

    per_row = -(confidence - smooth_val) * logp_t - smooth_val * sum_logp

    # Zero out rows that are pure batch padding so the outside sum is exact.
    row0 = pl.program_id(0) * tb
    row = row0 + jax.lax.broadcasted_iota(jnp.int32, (tb, 1), 0)
    out_ref[...] = jnp.where(row < batch, per_row, 0.0)


def label_smoothing_loss(pred, target, *, classes=None, smoothing=0.1,
                         block_b=1024):
    """Label-smoothing cross entropy (mean over batch) via a Pallas TPU kernel."""
    B, C = pred.shape
    if classes is None:
        classes = C
    assert classes == C, "classes must match pred.shape[-1]"
    assert block_b % 8 == 0, "block_b must be a multiple of 8 (sublane)"

    # Lane-dense class tile: pad C up to a multiple of 128.
    c_pad = _round_up(C, 128)
    itemsize = jnp.dtype(pred.dtype).itemsize

    # Batch tile: shrink until double-buffered tiles fit a v7x-safe VMEM budget.
    vmem_budget = 48 * 1024 * 1024
    tb = block_b
    while tb > 8 and 2 * 2 * tb * c_pad * itemsize > vmem_budget:
        tb //= 2
    tb = max(8, (tb // 8) * 8)
    # TODO(synk): for vocab-scale C where even TB=8 exceeds the budget, add a
    # class-axis grid ('arbitrary', last) with an online running-max/sum-of-exp.

    if B <= tb:
        tb = _round_up(B, 8)
        b_pad = tb
    else:
        b_pad = _round_up(B, tb)
    nb = b_pad // tb

    pred_p = pred
    if (b_pad, c_pad) != (B, C):
        pred_p = jnp.pad(pred, ((0, b_pad - B), (0, c_pad - C)))
    tgt = target.astype(jnp.int32).reshape(B, 1)
    if b_pad != B:
        tgt = jnp.pad(tgt, ((0, b_pad - B), (0, 0)))

    kernel = functools.partial(_label_smoothing_kernel, classes=int(C),
                               smoothing=float(smoothing), batch=int(B))

    # Raise the scoped VMEM limit to comfortably cover the double-buffered tiles.
    dbuf_bytes = 2 * (tb * c_pad * itemsize + 2 * tb * 4)
    vmem_limit = int(min(max(2 * dbuf_bytes, 16 * 1024 * 1024),
                         56 * 1024 * 1024))

    per_row = pl.pallas_call(
        kernel,
        out_shape=jax.ShapeDtypeStruct((b_pad, 1), jnp.float32),
        grid=(nb,),
        in_specs=[
            pl.BlockSpec((tb, c_pad), lambda i: (i, 0)),   # logits tile
            pl.BlockSpec((tb, 1), lambda i: (i, 0)),       # target indices tile
        ],
        out_specs=pl.BlockSpec((tb, 1), lambda i: (i, 0)),  # per-row losses
        compiler_params=pltpu.CompilerParams(
            dimension_semantics=("parallel",),
            vmem_limit_bytes=vmem_limit,
        ),
    )(pred_p, tgt)

    # Tiny final reduction outside the kernel (padded rows contribute 0).
    return jnp.sum(per_row) / jnp.float32(B)


def _ref_loss(pred, target, smoothing):
    logp = jax.nn.log_softmax(pred.astype(jnp.float32), axis=-1)
    n, c = pred.shape
    td = jnp.full((n, c), smoothing / (c - 1), dtype=jnp.float32)
    td = td.at[jnp.arange(n), target].set(1.0 - smoothing)
    return jnp.mean(jnp.sum(-td * logp, axis=-1))


if __name__ == "__main__":
    key = jax.random.PRNGKey(0)
    kp, kt = jax.random.split(key)

    # Small shapes consistent with the module defaults (classes=100).
    B, C = 8, 100
    smoothing = 0.1

    pred = jax.random.normal(kp, (B, C), dtype=jnp.float32)
    target = jax.random.randint(kt, (B,), 0, C, dtype=jnp.int32)

    loss = label_smoothing_loss(pred, target, classes=C, smoothing=smoothing)
    jax.block_until_ready(loss)
    ref = _ref_loss(pred, target, smoothing)
    assert jnp.allclose(loss, ref, atol=1e-4, rtol=1e-5), (float(loss), float(ref))

    # Second check: forces a multi-tile grid (nb=3) so batch padding/masking,
    # class padding, and the parallel grid path are all exercised.
    B2 = 40
    kp2, kt2 = jax.random.split(jax.random.PRNGKey(0))
    pred2 = jax.random.normal(kp2, (B2, C), dtype=jnp.float32)
    target2 = jax.random.randint(kt2, (B2,), 0, C, dtype=jnp.int32)
    loss2 = label_smoothing_loss(pred2, target2, classes=C, smoothing=smoothing,
                                 block_b=16)
    jax.block_until_ready(loss2)
    ref2 = _ref_loss(pred2, target2, smoothing)
    assert jnp.allclose(loss2, ref2, atol=1e-4, rtol=1e-5), (float(loss2), float(ref2))

    print("KERNEL_OK")
</pallas_src>

<mosaic_0001>
module attributes {stable_mosaic.version = 11 : i64} {
  func.func @_label_smoothing_kernel(%arg0: i32, %arg1: memref<8x128xf32, #tpu.memory_space<vmem>>, %arg2: memref<8x1xi32, #tpu.memory_space<vmem>>, %arg3: memref<8x1xf32, #tpu.memory_space<vmem>>) attributes {dimension_semantics = [#tpu.dimension_semantics<parallel>], iteration_bounds = array<i64: 1>, scalar_prefetch = 0 : i64, scratch_operands = 0 : i64, tpu.core_type = #tpu.core_type<tc>, window_params = [{transform_indices = @transform_0, window_bounds = array<i64: 8, 128>}, {transform_indices = @transform_1, window_bounds = array<i64: 8, 1>}, {transform_indices = @transform_2, window_bounds = array<i64: 8, 1>}]} {
    %c0 = arith.constant 0 : index
    %c0_0 = arith.constant 0 : index
    %0 = vector.load %arg1[%c0, %c0_0] : memref<8x128xf32, #tpu.memory_space<vmem>>, vector<8x128xf32>
    %1 = tpu.iota {dimensions = array<i32: 1>} : vector<8x128xi32>
    %c100_i32 = arith.constant 100 : i32
    %2 = vector.broadcast %c100_i32 : i32 to vector<8x128xi32>
    %3 = arith.cmpi slt, %1, %2 : vector<8x128xi32>
    %cst = arith.constant 0xFF800000 : f32
    %4 = vector.broadcast %cst : f32 to vector<8x128xf32>
    %5 = arith.select %3, %0, %4 : vector<8x128xi1>, vector<8x128xf32>
    %cst_1 = arith.constant dense<0xFF800000> : vector<8xf32>
    %6 = vector.multi_reduction <maximumf>, %5, %cst_1 [1] : vector<8x128xf32> to vector<8xf32>
    %7 = vector.shape_cast %6 : vector<8xf32> to vector<8x1xf32>
    %8 = vector.broadcast %7 : vector<8x1xf32> to vector<8x128xf32>
    %9 = arith.subf %5, %8 : vector<8x128xf32>
    %10 = math.exp %9 : vector<8x128xf32>
    %cst_2 = arith.constant dense<0.000000e+00> : vector<8xf32>
    %11 = vector.multi_reduction <add>, %10, %cst_2 [1] : vector<8x128xf32> to vector<8xf32>
    %12 = vector.shape_cast %11 : vector<8xf32> to vector<8x1xf32>
    %13 = math.log %12 : vector<8x1xf32>
    %cst_3 = arith.constant 0.000000e+00 : f32
    %14 = vector.broadcast %cst_3 : f32 to vector<8x128xf32>
    %15 = arith.select %3, %9, %14 : vector<8x128xi1>, vector<8x128xf32>
    %cst_4 = arith.constant dense<0.000000e+00> : vector<8xf32>
    %16 = vector.multi_reduction <add>, %15, %cst_4 [1] : vector<8x128xf32> to vector<8xf32>
    %17 = vector.shape_cast %16 : vector<8xf32> to vector<8x1xf32>
    %cst_5 = arith.constant 1.000000e+02 : f32
    %18 = vector.broadcast %cst_5 : f32 to vector<8x1xf32>
    %19 = arith.mulf %18, %13 : vector<8x1xf32>
    %20 = arith.subf %17, %19 : vector<8x1xf32>
    %c0_6 = arith.constant 0 : index
    %c0_7 = arith.constant 0 : index
    %21 = vector.load %arg2[%c0_6, %c0_7] : memref<8x1xi32, #tpu.memory_space<vmem>>, vector<8x1xi32>
    %22 = vector.broadcast %21 : vector<8x1xi32> to vector<8x128xi32>
    %23 = arith.cmpi eq, %1, %22 : vector<8x128xi32>
    %cst_8 = arith.constant 0.000000e+00 : f32
    %24 = vector.broadcast %cst_8 : f32 to vector<8x128xf32>
    %25 = arith.select %23, %9, %24 : vector<8x128xi1>, vector<8x128xf32>
    %cst_9 = arith.constant dense<0.000000e+00> : vector<8xf32>
    %26 = vector.multi_reduction <add>, %25, %cst_9 [1] : vector<8x128xf32> to vector<8xf32>
    %27 = vector.shape_cast %26 : vector<8xf32> to vector<8x1xf32>
    %28 = arith.subf %27, %13 : vector<8x1xf32>
    %cst_10 = arith.constant 0.899999976 : f32
    %cst_11 = arith.constant 0.00101010106 : f32
    %29 = arith.subf %cst_10, %cst_11 : f32
    %cst_12 = arith.constant 0.000000e+00 : f32
    %30 = arith.subf %cst_12, %29 : f32
    %31 = vector.broadcast %30 : f32 to vector<8x1xf32>
    %32 = arith.mulf %31, %28 : vector<8x1xf32>
    %cst_13 = arith.constant 0.00101010106 : f32
    %33 = vector.broadcast %cst_13 : f32 to vector<8x1xf32>
    %34 = arith.mulf %33, %20 : vector<8x1xf32>
    %35 = arith.subf %32, %34 : vector<8x1xf32>
    %c8_i32 = arith.constant 8 : i32
    %36 = arith.muli %arg0, %c8_i32 : i32
    %37 = tpu.iota {dimensions = array<i32: 0>} : vector<8x1xi32>
    %38 = vector.broadcast %36 : i32 to vector<8x1xi32>
    %39 = arith.addi %38, %37 : vector<8x1xi32>
    %c8_i32_14 = arith.constant 8 : i32
    %40 = vector.broadcast %c8_i32_14 : i32 to vector<8x1xi32>
    %41 = arith.cmpi slt, %39, %40 : vector<8x1xi32>
    %cst_15 = arith.constant 0.000000e+00 : f32
    %42 = vector.broadcast %cst_15 : f32 to vector<8x1xf32>
    %43 = arith.select %41, %35, %42 : vector<8x1xi1>, vector<8x1xf32>
    %c0_16 = arith.constant 0 : index
    %c0_17 = arith.constant 0 : index
    %44 = vector.load %arg3[%c0_16, %c0_17] : memref<8x1xf32, #tpu.memory_space<vmem>>, vector<8x1xf32>
    tpu.vector_store %arg3[%c0_16, %c0_17], %43 {strides = array<i32>} : memref<8x1xf32, #tpu.memory_space<vmem>>, vector<8x1xf32>,
    return
  }
  func.func @transform_0(%arg0: i32) -> (i32, i32) {
    %c0_i32 = arith.constant 0 : i32
    %c0_i32_0 = arith.constant 0 : i32
    return %arg0, %c0_i32 : i32, i32
  }
  func.func @transform_1(%arg0: i32) -> (i32, i32) {
    %c0_i32 = arith.constant 0 : i32
    %c0_i32_0 = arith.constant 0 : i32
    return %arg0, %c0_i32 : i32, i32
  }
  func.func @transform_2(%arg0: i32) -> (i32, i32) {
    %c0_i32 = arith.constant 0 : i32
    %c0_i32_0 = arith.constant 0 : i32
    return %arg0, %c0_i32 : i32, i32
  }
}

</mosaic_0001>

<llo_original>
// kernel: tpu_custom_call.1
$region0: #{tpu_custom_call.1}
  #allocation0 [shape = 'u32[]', space=smem, size = 0x4, offset = 0x4, fixed_abs, tag = 'smem constant byte address 0x4 - core index']
  #allocation1 [shape = 'u32[72,128]{1,0:T(1,128)}', space=vmem, size = 0x9000, scoped, tag = 'internal scratch']
  %s0 = inlined_call_operand.vmem [shape: f32[8,128], index: 0, kind: input, shape index: {}]
  %s1 = inlined_call_operand.vmem [shape: s32[8,1], index: 1, kind: input, shape index: {}]
  %s2 = inlined_call_operand.vmem [shape: f32[8,1], index: 2, kind: output, shape index: {}]
  %s3 = sld [smem:[#allocation0]]
  $region18: #{tpu_custom_call.1} parent=0
    _
  %s5 = ssub.s32 1, %s3
  %s6 = scalar_select 0, %s5, %s3
  // Predicated region
  $region2: #{tpu_custom_call.1} parent=0 // pred_check
    _
  $region3: #{tpu_custom_call.1} parent=0 // pred_check_branch
    %8 = sbr.rel (0) target = $region5
  $region4: #{tpu_custom_call.1} parent=0 // pred_region
    _
  $region5: #{tpu_custom_call.1} parent=0 // pred_fallthru
    _
  // Predicated region
  $region6: #{tpu_custom_call.1} parent=0 // pred_check
    _
  $region7: #{tpu_custom_call.1} parent=0 // pred_check_branch
    %10 = sbr.rel (0) target = $region9
  $region8: #{tpu_custom_call.1} parent=0 // pred_region
    _
  $region9: #{tpu_custom_call.1} parent=0 // pred_fallthru
    _
  %v11 = vld [vmem:[%s0] sm:$0xff]
  %v12 = vlaneseq
  %v13 = vand.u32 %v12, 127
  %vm14 = vcmp.lt.s32.totalorder %v13, 100
  %v15 = vsel %vm14, %v11, -inf
  %16 = vmax.xlane.f32.xlu0 %v15
  %v17 = vpop.xlane.xlu0 %16
  %v18 = vsub.f32 %v15, %v17
  %v19 = vmul.f32 %v18, 1.442695
  %v20 = vpow.pop %v19
  %21 = vadd.xlane.f32.xlu0 %v20
  %v22 = vpop.xlane.xlu0 %21
  %v23 = vlog2.pop %v22
  %v24 = vmul.f32 %v23, 0.6931472
  %v25 = vsel %vm14, %v18, 0.0
  %26 = vadd.xlane.f32.xlu0 %v25
  %v27 = vpop.xlane.xlu0 %26
  %v28 = vmul.f32 %v24, 100.0
  %v29 = vsub.f32 %v27, %v28
  %v30 = vld [vmem:[%s1] sm:$0xff]
  %31 = vset.pattern.permute.xlu0 0
  %32 = vperm.xlu0 %31, %v30
  %v33 = vpop.permute.xlu0 %32
  %vm34 = vcmp.eq.s32.totalorder %v13, %v33
  %v35 = vsel %vm34, %v18, 0.0
  %36 = vadd.xlane.f32.xlu0 %v35
  %v37 = vpop.xlane.xlu0 %36
  %v38 = vsub.f32 %v37, %v24
  %v39 = vmul.f32 %v38, -0.89898986
  %v40 = vmul.f32 %v29, 0.001010101
  %v41 = vsub.f32 %v39, %v40
  %s42 = smul.u32 0, 8
  %v43 = vlaneseq
  %v44 = vshrl.u32 %v43, 7
  %v45 = vstv %s42
  %v46 = vadd.s32 %v45, %v44
  %vm47 = vcmp.lt.s32.totalorder %v46, 8
  %v48 = vsel %vm47, %v41, 0.0
  %vm49 = vcmask 7168
  %50 = vst.msk [vmem:[%s2] sm:$0xff] %vm49, %v48
  // Predicated region
  $region10: #{tpu_custom_call.1} parent=0 // pred_check
    _
  $region11: #{tpu_custom_call.1} parent=0 // pred_check_branch
    %52 = sbr.rel (0) target = $region13
  $region12: #{tpu_custom_call.1} parent=0 // pred_region
    _
  $region13: #{tpu_custom_call.1} parent=0 // pred_fallthru
    _
  // Predicated region
  $region14: #{tpu_custom_call.1} parent=0 // pred_check
    _
  $region15: #{tpu_custom_call.1} parent=0 // pred_check_branch
    %54 = sbr.rel (0) target = $region17
  $region16: #{tpu_custom_call.1} parent=0 // pred_region
    _
  $region17: #{tpu_custom_call.1} parent=0 // pred_fallthru
    _

</llo_original>
